<compile_context>
chip_gen: v6e
topology: v6e:2x2x1
jax: 0.10.0
libtpu: 0.0.40
codegen_flags: <defaults>
</compile_context>

<pallas_src>
import jax
import jax.numpy as jnp
from jax.experimental import pallas as pl
from jax.experimental.pallas import tpu as pltpu


def _flow_kernel(scale_ref, shift_ref, x_ref, z_ref):
    # scale/shift: VMEM (TR, 1) f32 ; x/z: VMEM (TR, TL) in x.dtype.
    x = x_ref[...].astype(jnp.float32)
    z_ref[...] = (x * scale_ref[...] + shift_ref[...]).astype(z_ref.dtype)


_VMEM_LIMIT = 32 * 1024 * 1024   # scoped VMEM limit we request (legal on v5e/v6e/v7x)
_VMEM_BUDGET = 24 << 20          # working-set target, leaves headroom under the limit
_LANE_CAP = 16384                # max lane tile (multiple of 128)


def _pick_tiles(rows, hw, itemsize):
    """Pick (row_tile, lane_tile) for the flattened (rows, hw) view."""
    # Lane (last-dim) tile: full hw when small (always a legal block dim),
    # otherwise a multiple of 128 with a padded trailing block.
    tl = hw if hw <= _LANE_CAP else _LANE_CAP

    # Bytes per row per grid step, double-buffered:
    #   x tile + z tile (itemsize each) + 2 lane-padded (.,1)->(.,128) f32 params.
    per_row = 2 * (2 * tl * itemsize + 2 * 128 * 4)
    budget_rows = max(8, (_VMEM_BUDGET // per_row) // 8 * 8)

    if rows <= 8:
        tr = rows                                   # full extent is always legal
    elif rows % 8 == 0:
        tr = min(rows, budget_rows)
    elif rows <= budget_rows:
        tr = rows                                   # full extent, fits the budget
    else:
        tr = min((rows // 8) * 8, budget_rows)      # padded trailing block

    # Give megacore (v7x: 2 TCs) at least two grid steps when the shape allows it.
    if pl.cdiv(rows, tr) * pl.cdiv(hw, tl) < 2 and tr % 16 == 0:
        tr //= 2
    return tr, tl


def normalizing_flow_forward(x, scales, shifts):
    """x: [B, C, H, W]; scales/shifts: [K, C] f32 (per-channel affine transforms).

    Returns (z, log_dz_dx_sum), both shaped like x (matches NormalizingFlow.forward
    with a chain of per-channel affine transforms z = x * exp(s_k[c]) + b_k[c]).
    """
    B, C, H, W = x.shape
    K = scales.shape[0]
    rows, hw = B * C, H * W
    itemsize = jnp.dtype(x.dtype).itemsize

    # Fold the K affine transforms into one composed affine (tiny K x C work in XLA):
    #   z = x * prod_k exp(s_k[c]) + fold_k(shift)     log|dz/dx| = sum_k s_k[c]
    # (Composed vs. sequential rounding differs at ~1e-7 rel for small |s|.)
    es = jnp.exp(scales.astype(jnp.float32))                  # [K, C]
    total_scale = jnp.prod(es, axis=0)                        # [C]
    total_shift = jnp.zeros((C,), jnp.float32)
    for k in range(K):                                        # K is small & static
        total_shift = total_shift * es[k] + shifts[k].astype(jnp.float32)
    total_ld = jnp.sum(scales.astype(jnp.float32), axis=0)    # [C]

    # Per-row (b, c) parameter columns for the flattened (B*C, H*W) view.
    scale_rows = jnp.tile(total_scale, B).reshape(rows, 1)
    shift_rows = jnp.tile(total_shift, B).reshape(rows, 1)

    # Lane-dense flattened view, input dtype preserved (no f32 up-cast of the stream).
    x2 = x.reshape(rows, hw)

    tr, tl = _pick_tiles(rows, hw, itemsize)
    grid = (pl.cdiv(rows, tr), pl.cdiv(hw, tl))

    row_spec = pl.BlockSpec((tr, 1), lambda i, j: (i, 0))   # re-DMA'd only when i changes
    tile_spec = pl.BlockSpec((tr, tl), lambda i, j: (i, j))

    z2 = pl.pallas_call(
        _flow_kernel,
        out_shape=jax.ShapeDtypeStruct((rows, hw), x.dtype),
        grid_spec=pltpu.PrefetchScalarGridSpec(
            num_scalar_prefetch=0,
            grid=grid,
            in_specs=[row_spec, row_spec, tile_spec],
            out_specs=tile_spec,
        ),
        compiler_params=pltpu.CompilerParams(
            dimension_semantics=("parallel", "parallel"),
            vmem_limit_bytes=_VMEM_LIMIT,
        ),
    )(scale_rows, shift_rows, x2)

    z = z2.reshape(B, C, H, W)
    # log|dz/dx| is a per-channel constant: produce the full-shape output with a
    # single broadcast in the wrapper instead of an extra HBM write stream from the
    # kernel (same values / shape as the PyTorch module).
    log_dz_dx_sum = jnp.broadcast_to(total_ld.reshape(1, C, 1, 1), x.shape).astype(x.dtype)
    return z, log_dz_dx_sum


def _reference(x, scales, shifts):
    # Pure-JAX reference mirroring NormalizingFlow.forward with affine transforms.
    z = x.astype(jnp.float32)
    ld_sum = jnp.zeros(x.shape, jnp.float32)
    K, C = scales.shape
    for k in range(K):
        s = scales[k].reshape(1, C, 1, 1)
        b = shifts[k].reshape(1, C, 1, 1)
        z = z * jnp.exp(s) + b
        ld_sum = ld_sum + jnp.broadcast_to(s, x.shape)
    return z, ld_sum


# TODO(synk): NormalizingFlow.backward (inverse transform chain) is not implemented;
# only the forward pass is fused here.

if __name__ == "__main__":
    key = jax.random.PRNGKey(0)
    kx, ks, kb = jax.random.split(key, 3)

    B, C, H, W = 2, 4, 16, 16
    K = 3  # number of transforms in the flow

    x = jax.random.normal(kx, (B, C, H, W), dtype=jnp.float32)
    scales = 0.1 * jax.random.normal(ks, (K, C), dtype=jnp.float32)
    shifts = 0.1 * jax.random.normal(kb, (K, C), dtype=jnp.float32)

    z, log_dz_dx_sum = normalizing_flow_forward(x, scales, shifts)
    jax.block_until_ready((z, log_dz_dx_sum))

    z_ref, ld_ref = _reference(x, scales, shifts)
    assert z.dtype == x.dtype and log_dz_dx_sum.dtype == x.dtype
    assert jnp.allclose(z.astype(jnp.float32), z_ref, atol=1e-5, rtol=1e-5), "z mismatch"
    assert jnp.allclose(log_dz_dx_sum.astype(jnp.float32), ld_ref,
                        atol=1e-5, rtol=1e-5), "logdet mismatch"

    print("KERNEL_OK")
</pallas_src>

<mosaic_0001>
module attributes {stable_mosaic.version = 11 : i64} {
  func.func @_flow_kernel(%arg0: i32, %arg1: i32, %arg2: memref<8x1xf32, #tpu.memory_space<vmem>>, %arg3: memref<8x1xf32, #tpu.memory_space<vmem>>, %arg4: memref<8x256xf32, #tpu.memory_space<vmem>>, %arg5: memref<8x256xf32, #tpu.memory_space<vmem>>) attributes {dimension_semantics = [#tpu.dimension_semantics<parallel>, #tpu.dimension_semantics<parallel>], iteration_bounds = array<i64: 1, 1>, scalar_prefetch = 0 : i64, scratch_operands = 0 : i64, tpu.core_type = #tpu.core_type<tc>, window_params = [{transform_indices = @transform_0, window_bounds = array<i64: 8, 1>}, {transform_indices = @transform_1, window_bounds = array<i64: 8, 1>}, {transform_indices = @transform_2, window_bounds = array<i64: 8, 256>}, {transform_indices = @transform_3, window_bounds = array<i64: 8, 256>}]} {
    %c0 = arith.constant 0 : index
    %c0_0 = arith.constant 0 : index
    %0 = vector.load %arg4[%c0, %c0_0] : memref<8x256xf32, #tpu.memory_space<vmem>>, vector<8x256xf32>
    %c0_1 = arith.constant 0 : index
    %c0_2 = arith.constant 0 : index
    %1 = vector.load %arg2[%c0_1, %c0_2] : memref<8x1xf32, #tpu.memory_space<vmem>>, vector<8x1xf32>
    %2 = vector.broadcast %1 : vector<8x1xf32> to vector<8x256xf32>
    %3 = arith.mulf %0, %2 : vector<8x256xf32>
    %c0_3 = arith.constant 0 : index
    %c0_4 = arith.constant 0 : index
    %4 = vector.load %arg3[%c0_3, %c0_4] : memref<8x1xf32, #tpu.memory_space<vmem>>, vector<8x1xf32>
    %5 = vector.broadcast %4 : vector<8x1xf32> to vector<8x256xf32>
    %6 = arith.addf %3, %5 : vector<8x256xf32>
    %c0_5 = arith.constant 0 : index
    %c0_6 = arith.constant 0 : index
    %7 = vector.load %arg5[%c0_5, %c0_6] : memref<8x256xf32, #tpu.memory_space<vmem>>, vector<8x256xf32>
    tpu.vector_store %arg5[%c0_5, %c0_6], %6 {strides = array<i32>} : memref<8x256xf32, #tpu.memory_space<vmem>>, vector<8x256xf32>,
    return
  }
  func.func @transform_0(%arg0: i32, %arg1: i32) -> (i32, i32) {
    %c0_i32 = arith.constant 0 : i32
    %c0_i32_0 = arith.constant 0 : i32
    return %arg0, %c0_i32 : i32, i32
  }
  func.func @transform_1(%arg0: i32, %arg1: i32) -> (i32, i32) {
    %c0_i32 = arith.constant 0 : i32
    %c0_i32_0 = arith.constant 0 : i32
    return %arg0, %c0_i32 : i32, i32
  }
  func.func @transform_2(%arg0: i32, %arg1: i32) -> (i32, i32) {
    %c0_i32 = arith.constant 0 : i32
    return %arg0, %arg1 : i32, i32
  }
  func.func @transform_3(%arg0: i32, %arg1: i32) -> (i32, i32) {
    %c0_i32 = arith.constant 0 : i32
    return %arg0, %arg1 : i32, i32
  }
}

</mosaic_0001>

<llo_original>
// kernel: tpu_custom_call.1
$region0: #{tpu_custom_call.1}
  #allocation0 [shape = 'u32[]', space=smem, size = 0x4, offset = 0x4, fixed_abs, tag = 'smem constant byte address 0x4 - core index']
  #allocation1 [shape = 'u32[144,128]{1,0:T(1,128)}', space=vmem, size = 0x12000, scoped, tag = 'internal scratch']
  %s0 = inlined_call_operand.vmem [shape: f32[8,1], index: 0, kind: input, shape index: {}]
  %s1 = inlined_call_operand.vmem [shape: f32[8,1], index: 1, kind: input, shape index: {}]
  %s2 = inlined_call_operand.vmem [shape: f32[8,256], index: 2, kind: input, shape index: {}]
  %s3 = inlined_call_operand.hbm [shape: f32[8,256], index: 3, kind: output, shape index: {}]
  %s4 = sld [smem:[#allocation0]]
  $region22: #{tpu_custom_call.1} parent=0
    _
  %s6 = ssub.s32 1, %s4
  %s7 = scalar_select 0, %s6, %s4
  $region1: #{tpu_custom_call.1} parent=0
    #allocation2 [shape = 'u8[8192]{0}', space=vmem, size = 0x2000, scoped, tag = 'output window, operand 0, single buffered']
    #allocation3 [shape = 's32[1]{0}', space=sflag, size = 0x4, scoped, tag = 'scoped memory for tpu_custom_call.1']
    %8 = vsyncpa [#allocation3], 0
    // Predicated region
    $region2: #{tpu_custom_call.1} parent=1 // pred_check
      _
    $region3: #{tpu_custom_call.1} parent=1 // pred_check_branch
      %10 = sbr.rel (0) target = $region5
    $region4: #{tpu_custom_call.1} parent=1 // pred_region
      _
    $region5: #{tpu_custom_call.1} parent=1 // pred_fallthru
      _
    // Predicated region
    $region6: #{tpu_custom_call.1} parent=1 // pred_check
      _
    $region7: #{tpu_custom_call.1} parent=1 // pred_check_branch
      %12 = sbr.rel (0) target = $region9
    $region8: #{tpu_custom_call.1} parent=1 // pred_region
      _
    $region9: #{tpu_custom_call.1} parent=1 // pred_fallthru
      _
    // Predicated region
    $region10: #{tpu_custom_call.1} parent=1 // pred_check
      _
    $region11: #{tpu_custom_call.1} parent=1 // pred_check_branch
      %14 = sbr.rel (0) target = $region13
    $region12: #{tpu_custom_call.1} parent=1 // pred_region
      _
    $region13: #{tpu_custom_call.1} parent=1 // pred_fallthru
      _
    %v15 = vld [vmem:[%s2] sm:$0xff]
    %v16 = vld [vmem:[%s2 + $0x8] sm:$0xff]
    %v17 = vld [vmem:[%s0] sm:$0xff]
    %19 = vset.pattern.permute.xlu0 0
    %20 = vperm.xlu0 %19, %v17
    %v21 = vpop.permute.xlu0 %20
    %v23 = vmul.f32 %v15, %v21
    %v24 = vmul.f32 %v16, %v21
    %v25 = vld [vmem:[%s1] sm:$0xff]
    %27 = vset.pattern.permute.xlu0 0
    %28 = vperm.xlu0 %27, %v25
    %v29 = vpop.permute.xlu0 %28
    %v31 = vadd.f32 %v23, %v29
    %v32 = vadd.f32 %v24, %v29
    %33 = vst [vmem:[#allocation2] sm:$0xff] %v31
    %34 = vst [vmem:[#allocation2 + $0x8] sm:$0xff] %v32
    // Predicated region
    $region14: #{tpu_custom_call.1} parent=1 // pred_check
      _
    $region15: #{tpu_custom_call.1} parent=1 // pred_check_branch
      %36 = sbr.rel (0) target = $region17
    $region16: #{tpu_custom_call.1} parent=1 // pred_region
      %s38 = ssub.s32 256, 256
      %39 = vsyncadd [#allocation3], %s38
      %s41 = sshll.u32 [#allocation2], 4
      %s42 = int_to_ptr.vmem [resolvable:$true] %s41
      %44 = dma.vmem_to_hbm [thread:$0]  %s42, 256, %s3, [#allocation3]
    $region17: #{tpu_custom_call.1} parent=1 // pred_fallthru
      _
    // Predicated region
    $region18: #{tpu_custom_call.1} parent=1 // pred_check
      _
    $region19: #{tpu_custom_call.1} parent=1 // pred_check_branch
      %46 = sbr.rel (0) target = $region21
    $region20: #{tpu_custom_call.1} parent=1 // pred_region
      %47 = dma.done [#allocation3], 256
    $region21: #{tpu_custom_call.1} parent=1 // pred_fallthru
      _
    %48 = vsyncpa [#allocation3], 1

</llo_original>
